<compile_context>
chip_gen: v7x
topology: tpu7x:2x2x1
jax: 0.10.0
libtpu: 0.0.40
codegen_flags: <defaults>
</compile_context>

<pallas_src>
import functools
import math

import jax
import jax.numpy as jnp
from jax.experimental import pallas as pl
from jax.experimental.pallas import tpu as pltpu


def _time2vec_kernel(tau_ref, w_ref, b_ref, o_ref, *, n_out, n_pow2):
    # tau_ref: (tg, P*K)  w_ref: (P*K, P*N)  b_ref: (1, P*N)  o_ref: (tg, P*N)
    y = jnp.dot(tau_ref[...], w_ref[...],
                preferred_element_type=jnp.float32) + b_ref[...]
    # Lane j holds feature (j % n_out) of packed logical row (j // n_out);
    # feature n_out-1 is the linear term.  The mask lives on a single
    # (1, lanes) row (negligible VALU cost) and is broadcast by the select.
    lanes = y.shape[-1]
    col = jax.lax.broadcasted_iota(jnp.int32, (1, lanes), 1)
    feat = (col & (n_out - 1)) if n_pow2 else (col % n_out)
    is_linear = feat == (n_out - 1)
    o_ref[...] = jnp.where(is_linear, y, jnp.sin(y)).astype(o_ref.dtype)


def _pick_pack_factor(in_features, out_features, itemsize=4,
                      max_w_bytes=2 << 20):
    """Row-packing factor P: make P*N (and, if cheap, P*K) multiples of 128."""
    k, n = in_features, out_features
    p_out = 128 // math.gcd(128, n)            # output lanes dense
    p_in = 128 // math.gcd(128, k)             # input lanes dense
    p_both = p_out * p_in // math.gcd(p_out, p_in)
    for p in (p_both, p_out):
        if (p * k) * (p * n) * itemsize <= max_w_bytes:
            return p
    return 1                                    # narrow-store fallback


_TARGET_ROWS = 32 * 1024      # logical rows per grid step (cap)
_MIN_ROWS = 16 * 1024         # don't shrink per-step work below this
_TARGET_STEPS = 8             # aim for >=8 grid steps (>=4 per v7x TC)


def time2vec(tau, w, b, w0, b0):
    """tau: (..., in_features) -> (..., out_features). Matches t2v(..., sin)."""
    orig_shape = tau.shape
    K = orig_shape[-1]
    N = w.shape[1] + 1                                     # out_features
    tau2 = tau.reshape(-1, K)                              # free reshape
    M = tau2.shape[0]

    P = _pick_pack_factor(K, N)

    # Fused parameters (block-diagonal expansion when packing rows).
    W_full = jnp.concatenate([w, w0], axis=-1)             # (K, N)
    B_full = jnp.concatenate([b, b0], axis=-1)             # (N,)
    if P > 1:
        W_big = jnp.kron(jnp.eye(P, dtype=W_full.dtype), W_full)  # (P*K, P*N)
        B_big = jnp.tile(B_full, P)[None, :]                       # (1, P*N)
    else:
        W_big, B_big = W_full, B_full[None, :]

    # Pad rows only to a multiple of P (<= P-1 dead rows).  The partial last
    # grid block is masked by Pallas, so no padding to a tile multiple.
    Mp = pl.cdiv(M, P) * P
    if Mp != M:
        tau2 = jnp.pad(tau2, ((0, Mp - M), (0, 0)))
    Gp = Mp // P                                           # packed rows
    tau_packed = tau2.reshape(Gp, P * K)                   # contiguous reshape

    # Row tile in packed rows: big steps (amortize ~0.35 us/step overhead),
    # but >= _TARGET_STEPS steps on large inputs so both v7x TCs can pipeline.
    target = max(8, _TARGET_ROWS // P)
    floor = max(8, _MIN_ROWS // P)
    desired = pl.cdiv(pl.cdiv(Gp, _TARGET_STEPS), 8) * 8
    tg = max(floor, min(target, desired))
    if tg >= Gp:
        tg = Gp                      # single full-dim block (always legal)
    grid = pl.cdiv(Gp, tg)

    n_pow2 = (N & (N - 1)) == 0
    kernel = functools.partial(_time2vec_kernel, n_out=N, n_pow2=n_pow2)

    cost = pl.CostEstimate(
        flops=2 * M * K * N,
        transcendentals=M * max(N - 1, 0),
        bytes_accessed=(Mp * K + Mp * N) * 4 + W_big.size * 4,
    )

    out = pl.pallas_call(
        kernel,
        out_shape=jax.ShapeDtypeStruct((Gp, P * N), tau.dtype),
        grid=(grid,),
        in_specs=[
            pl.BlockSpec((tg, P * K), lambda i: (i, 0)),
            # W_big/B_big use constant-index blocks; their double-buffered
            # ~1 MiB is trivial vs the 32 MiB limit we request below.
            pl.BlockSpec((P * K, P * N), lambda i: (0, 0)),
            pl.BlockSpec((1, P * N), lambda i: (0, 0)),
        ],
        out_specs=pl.BlockSpec((tg, P * N), lambda i: (i, 0)),
        compiler_params=pltpu.CompilerParams(
            dimension_semantics=("parallel",),
            vmem_limit_bytes=32 * 1024 * 1024),
        cost_estimate=cost,
    )(tau_packed, W_big, B_big)

    out = out.reshape(Mp, N)                               # contiguous reshape
    if Mp != M:
        out = out[:M]                                      # <= P-1 rows trimmed
    return out.reshape(*orig_shape[:-1], N)


def time2vec_ref(tau, w, b, w0, b0):
    v1 = jnp.sin(jnp.matmul(tau, w) + b)
    v2 = jnp.matmul(tau, w0) + b0
    return jnp.concatenate([v1, v2], axis=-1)


if __name__ == "__main__":
    in_features = 4
    out_features = 32
    batch, seq = 2, 8

    key = jax.random.PRNGKey(0)
    k_tau, k_w0, k_b0, k_w, k_b, k_tau2 = jax.random.split(key, 6)

    # deterministic "randn"-style params (shapes from the module __init__)
    w0 = jax.random.normal(k_w0, (in_features, 1), jnp.float32)
    b0 = jax.random.normal(k_b0, (1,), jnp.float32)
    w = jax.random.normal(k_w, (in_features, out_features - 1), jnp.float32)
    b = jax.random.normal(k_b, (out_features - 1,), jnp.float32)

    # Case 1: shape implied by the module usage.
    tau = jax.random.normal(k_tau, (batch, seq, in_features), jnp.float32)
    out = jax.block_until_ready(time2vec(tau, w, b, w0, b0))
    ref = time2vec_ref(tau, w, b, w0, b0)
    assert out.shape == (batch, seq, out_features), out.shape
    assert jnp.allclose(out, ref, atol=1e-5, rtol=1e-5), (
        float(jnp.max(jnp.abs(out - ref))))

    # Case 2: ragged row count (exercises the pad-to-P / partial-block path).
    tau_b = jax.random.normal(k_tau2, (3, 50, in_features), jnp.float32)
    out_b = jax.block_until_ready(time2vec(tau_b, w, b, w0, b0))
    ref_b = time2vec_ref(tau_b, w, b, w0, b0)
    assert out_b.shape == (3, 50, out_features), out_b.shape
    assert jnp.allclose(out_b, ref_b, atol=1e-5, rtol=1e-5), (
        float(jnp.max(jnp.abs(out_b - ref_b))))

    print("KERNEL_OK")
</pallas_src>

<mosaic_0001>
module attributes {stable_mosaic.version = 11 : i64} {
  func.func @_time2vec_kernel(%arg0: i32, %arg1: memref<1x128xf32, #tpu.memory_space<vmem>>, %arg2: memref<128x1024xf32, #tpu.memory_space<vmem>>, %arg3: memref<1x1024xf32, #tpu.memory_space<vmem>>, %arg4: memref<1x1024xf32, #tpu.memory_space<vmem>>) attributes {dimension_semantics = [#tpu.dimension_semantics<parallel>], iteration_bounds = array<i64: 1>, scalar_prefetch = 0 : i64, scratch_operands = 0 : i64, tpu.core_type = #tpu.core_type<tc>, window_params = [{transform_indices = @transform_0, window_bounds = array<i64: 1, 128>}, {pipeline_mode = #tpu.pipeline_mode<synchronous>, transform_indices = @transform_1, window_bounds = array<i64: 128, 1024>}, {pipeline_mode = #tpu.pipeline_mode<synchronous>, transform_indices = @transform_2, window_bounds = array<i64: 1, 1024>}, {transform_indices = @transform_3, window_bounds = array<i64: 1, 1024>}]} {
    %c0 = arith.constant 0 : index
    %c0_0 = arith.constant 0 : index
    %0 = vector.load %arg1[%c0, %c0_0] : memref<1x128xf32, #tpu.memory_space<vmem>>, vector<1x128xf32>
    %c0_1 = arith.constant 0 : index
    %c0_2 = arith.constant 0 : index
    %1 = vector.load %arg2[%c0_1, %c0_2] : memref<128x1024xf32, #tpu.memory_space<vmem>>, vector<128x1024xf32>
    %cst = arith.constant dense<0.000000e+00> : vector<1x1024xf32>
    %2 = tpu.matmul %0, %1, %cst {dimension_numbers = #tpu.dot_dimension_numbers<[1], [0], [0], [1], [0, 0, 1, 1], [], []>} : vector<1x128xf32>, vector<128x1024xf32>, vector<1x1024xf32> -> vector<1x1024xf32>
    %c0_3 = arith.constant 0 : index
    %c0_4 = arith.constant 0 : index
    %3 = vector.load %arg3[%c0_3, %c0_4] : memref<1x1024xf32, #tpu.memory_space<vmem>>, vector<1x1024xf32>
    %4 = arith.addf %2, %3 : vector<1x1024xf32>
    %5 = tpu.iota {dimensions = array<i32: 1>} : vector<1x1024xi32>
    %c31_i32 = arith.constant 31 : i32
    %6 = vector.broadcast %c31_i32 : i32 to vector<1x1024xi32>
    %7 = arith.andi %5, %6 : vector<1x1024xi32>
    %c31_i32_5 = arith.constant 31 : i32
    %8 = vector.broadcast %c31_i32_5 : i32 to vector<1x1024xi32>
    %9 = arith.cmpi eq, %7, %8 : vector<1x1024xi32>
    %10 = math.sin %4 : vector<1x1024xf32>
    %11 = arith.select %9, %4, %10 : vector<1x1024xi1>, vector<1x1024xf32>
    %c0_6 = arith.constant 0 : index
    %c0_7 = arith.constant 0 : index
    %12 = vector.load %arg4[%c0_6, %c0_7] : memref<1x1024xf32, #tpu.memory_space<vmem>>, vector<1x1024xf32>
    tpu.vector_store %arg4[%c0_6, %c0_7], %11 {strides = array<i32>} : memref<1x1024xf32, #tpu.memory_space<vmem>>, vector<1x1024xf32>,
    return
  }
  func.func @transform_0(%arg0: i32) -> (i32, i32) {
    %c0_i32 = arith.constant 0 : i32
    %c0_i32_0 = arith.constant 0 : i32
    return %arg0, %c0_i32 : i32, i32
  }
  func.func @transform_1(%arg0: i32) -> (i32, i32) {
    %c0_i32 = arith.constant 0 : i32
    %c0_i32_0 = arith.constant 0 : i32
    %c0_i32_1 = arith.constant 0 : i32
    return %c0_i32, %c0_i32_0 : i32, i32
  }
  func.func @transform_2(%arg0: i32) -> (i32, i32) {
    %c0_i32 = arith.constant 0 : i32
    %c0_i32_0 = arith.constant 0 : i32
    %c0_i32_1 = arith.constant 0 : i32
    return %c0_i32, %c0_i32_0 : i32, i32
  }
  func.func @transform_3(%arg0: i32) -> (i32, i32) {
    %c0_i32 = arith.constant 0 : i32
    %c0_i32_0 = arith.constant 0 : i32
    return %arg0, %c0_i32 : i32, i32
  }
}

</mosaic_0001>

<llo_original>
// kernel: tpu_custom_call.1
$region0: #{tpu_custom_call.1}
  #allocation0 [shape = 'u32[]', space=smem, size = 0x4, offset = 0x4, fixed_abs, tag = 'smem constant byte address 0x4 - core index']
  #allocation1 [shape = 'u32[144,128]{1,0:T(1,128)}', space=vmem, size = 0x12000, scoped, tag = 'internal scratch']
  %s0 = inlined_call_operand.hbm [shape: f32[1,128], index: 0, kind: input, shape index: {}]
  %s1 = inlined_call_operand.hbm [shape: f32[128,1024], index: 1, kind: input, shape index: {}]
  %s2 = inlined_call_operand.hbm [shape: f32[1,1024], index: 2, kind: input, shape index: {}]
  %s3 = inlined_call_operand.hbm [shape: f32[1,1024], index: 3, kind: output, shape index: {}]
  %s4 = sld [smem:[#allocation0]]
  $region34: #{tpu_custom_call.1} parent=0
    _
  %s6 = ssub.s32 1, %s4
  %s7 = scalar_select 0, %s6, %s4
  $region1: #{tpu_custom_call.1} parent=0
    #allocation2 [shape = 'u8[512]{0}', space=vmem, size = 0x400, scoped, tag = 'input window, operand 0, single buffered']
    #allocation3 [shape = 's32[1]{0}', space=sflag, size = 0x4, scoped, tag = 'scoped memory for tpu_custom_call.1']
    #allocation4 [shape = 's32[1]{0}', space=sflag, size = 0x4, scoped, tag = 'scoped memory for tpu_custom_call.1']
    #allocation5 [shape = 'u8[524288]{0}', space=vmem, size = 0x80000, scoped, tag = 'input window, operand 1, single buffered']
    #allocation6 [shape = 's32[1]{0}', space=sflag, size = 0x4, scoped, tag = 'scoped memory for tpu_custom_call.1']
    #allocation7 [shape = 'u8[4096]{0}', space=vmem, size = 0x1000, scoped, tag = 'input window, operand 2, single buffered']
    #allocation8 [shape = 'u8[4096]{0}', space=vmem, size = 0x1000, scoped, tag = 'output window, operand 0, single buffered']
    %8 = vsyncpa [#allocation3], 0
    %9 = vsyncpa [#allocation6], 0
    %10 = vsyncpa [#allocation4], 0
    // Predicated region
    $region2: #{tpu_custom_call.1} parent=1 // pred_check
      _
    $region3: #{tpu_custom_call.1} parent=1 // pred_check_branch
      %12 = sbr.rel (0) target = $region5
    $region4: #{tpu_custom_call.1} parent=1 // pred_region
      %s14 = ssub.s32 16, 16
      %15 = vsyncadd [#allocation3], %s14
      %s17 = sshll.u32 [#allocation2], 4
      %s18 = int_to_ptr.vmem [resolvable:$true] %s17
      %20 = dma.hbm_to_vmem [thread:$0]  %s0, 16, %s18, [#allocation3]
    $region5: #{tpu_custom_call.1} parent=1 // pred_fallthru
      _
    // Predicated region
    $region6: #{tpu_custom_call.1} parent=1 // pred_check
      _
    $region7: #{tpu_custom_call.1} parent=1 // pred_check_branch
      %22 = sbr.rel (0) target = $region9
    $region8: #{tpu_custom_call.1} parent=1 // pred_region
      %s24 = ssub.s32 16384, 16384
      %25 = vsyncadd [#allocation6], %s24
      %s26 = sshll.u32 [#allocation5], 4
      %s27 = int_to_ptr.vmem [resolvable:$true] %s26
      %32 = dma.hbm_to_vmem [thread:$0]  %s1, 16384, %s27, [#allocation6], 1024, 1024, 64
    $region9: #{tpu_custom_call.1} parent=1 // pred_fallthru
      _
    // Predicated region
    $region10: #{tpu_custom_call.1} parent=1 // pred_check
      _
    $region11: #{tpu_custom_call.1} parent=1 // pred_check_branch
      %34 = sbr.rel (0) target = $region13
    $region12: #{tpu_custom_call.1} parent=1 // pred_region
      %s36 = ssub.s32 128, 128
      %37 = vsyncadd [#allocation6], %s36
      %s39 = sshll.u32 [#allocation7], 4
      %s40 = int_to_ptr.vmem [resolvable:$true] %s39
      %42 = dma.hbm_to_vmem [thread:$0]  %s2, 128, %s40, [#allocation6]
    $region13: #{tpu_custom_call.1} parent=1 // pred_fallthru
      _
    // Predicated region
    $region14: #{tpu_custom_call.1} parent=1 // pred_check
      _
    $region15: #{tpu_custom_call.1} parent=1 // pred_check_branch
      %44 = sbr.rel (0) target = $region17
    $region16: #{tpu_custom_call.1} parent=1 // pred_region
      %45 = dma.done [#allocation3], 16
    $region17: #{tpu_custom_call.1} parent=1 // pred_fallthru
      _
    // Predicated region
    $region18: #{tpu_custom_call.1} parent=1 // pred_check
      _
    $region19: #{tpu_custom_call.1} parent=1 // pred_check_branch
      %47 = sbr.rel (0) target = $region21
    $region20: #{tpu_custom_call.1} parent=1 // pred_region
      %48 = dma.done [#allocation6], 16384
    $region21: #{tpu_custom_call.1} parent=1 // pred_fallthru
      _
    // Predicated region
    $region22: #{tpu_custom_call.1} parent=1 // pred_check
      _
    $region23: #{tpu_custom_call.1} parent=1 // pred_check_branch
      %50 = sbr.rel (0) target = $region25
    $region24: #{tpu_custom_call.1} parent=1 // pred_region
      %51 = dma.done [#allocation6], 128
    $region25: #{tpu_custom_call.1} parent=1 // pred_fallthru
      _
    %v52 = vld [vmem:[#allocation2] sm:$0x1]
    %v53 = vld [vmem:[#allocation5] sm:$0xff]
    %v54 = vld [vmem:[#allocation5 + $0x8] sm:$0xff]
    %v55 = vld [vmem:[#allocation5 + $0x10] sm:$0xff]
    %v56 = vld [vmem:[#allocation5 + $0x18] sm:$0xff]
    %v57 = vld [vmem:[#allocation5 + $0x20] sm:$0xff]
    %v58 = vld [vmem:[#allocation5 + $0x28] sm:$0xff]
    %v59 = vld [vmem:[#allocation5 + $0x30] sm:$0xff]
    %v60 = vld [vmem:[#allocation5 + $0x38] sm:$0xff]
    %v61 = vld [vmem:[#allocation5 + $0x40] sm:$0xff]
    %v62 = vld [vmem:[#allocation5 + $0x48] sm:$0xff]
    %v63 = vld [vmem:[#allocation5 + $0x50] sm:$0xff]
    %v64 = vld [vmem:[#allocation5 + $0x58] sm:$0xff]
    %v65 = vld [vmem:[#allocation5 + $0x60] sm:$0xff]
    %v66 = vld [vmem:[#allocation5 + $0x68] sm:$0xff]
    %v67 = vld [vmem:[#allocation5 + $0x70] sm:$0xff]
    %v68 = vld [vmem:[#allocation5 + $0x78] sm:$0xff]
    %v69 = vld [vmem:[#allocation5 + $0x80] sm:$0xff]
    %v70 = vld [vmem:[#allocation5 + $0x88] sm:$0xff]
    %v71 = vld [vmem:[#allocation5 + $0x90] sm:$0xff]
    %v72 = vld [vmem:[#allocation5 + $0x98] sm:$0xff]
    %v73 = vld [vmem:[#allocation5 + $0xa0] sm:$0xff]
    %v74 = vld [vmem:[#allocation5 + $0xa8] sm:$0xff]
    %v75 = vld [vmem:[#allocation5 + $0xb0] sm:$0xff]
    %v76 = vld [vmem:[#allocation5 + $0xb8] sm:$0xff]
    %v77 = vld [vmem:[#allocation5 + $0xc0] sm:$0xff]
    %v78 = vld [vmem:[#allocation5 + $0xc8] sm:$0xff]
    %v79 = vld [vmem:[#allocation5 + $0xd0] sm:$0xff]
    %v80 = vld [vmem:[#allocation5 + $0xd8] sm:$0xff]
    %v81 = vld [vmem:[#allocation5 + $0xe0] sm:$0xff]
    %v82 = vld [vmem:[#allocation5 + $0xe8] sm:$0xff]
    %v83 = vld [vmem:[#allocation5 + $0xf0] sm:$0xff]
    %v84 = vld [vmem:[#allocation5 + $0xf8] sm:$0xff]
    %v85 = vld [vmem:[#allocation5 + $0x100] sm:$0xff]
    %v86 = vld [vmem:[#allocation5 + $0x108] sm:$0xff]
    %v87 = vld [vmem:[#allocation5 + $0x110] sm:$0xff]
    %v88 = vld [vmem:[#allocation5 + $0x118] sm:$0xff]
    %v89 = vld [vmem:[#allocation5 + $0x120] sm:$0xff]
    %v90 = vld [vmem:[#allocation5 + $0x128] sm:$0xff]
    %v91 = vld [vmem:[#allocation5 + $0x130] sm:$0xff]
    %v92 = vld [vmem:[#allocation5 + $0x138] sm:$0xff]
    %v93 = vld [vmem:[#allocation5 + $0x140] sm:$0xff]
    %v94 = vld [vmem:[#allocation5 + $0x148] sm:$0xff]
    %v95 = vld [vmem:[#allocation5 + $0x150] sm:$0xff]
    %v96 = vld [vmem:[#allocation5 + $0x158] sm:$0xff]
    %v97 = vld [vmem:[#allocation5 + $0x160] sm:$0xff]
    %v98 = vld [vmem:[#allocation5 + $0x168] sm:$0xff]
    %v99 = vld [vmem:[#allocation5 + $0x170] sm:$0xff]
    %v100 = vld [vmem:[#allocation5 + $0x178] sm:$0xff]
    %v101 = vld [vmem:[#allocation5 + $0x180] sm:$0xff]
    %v102 = vld [vmem:[#allocation5 + $0x188] sm:$0xff]
    %v103 = vld [vmem:[#allocation5 + $0x190] sm:$0xff]
    %v104 = vld [vmem:[#allocation5 + $0x198] sm:$0xff]
    %v105 = vld [vmem:[#allocation5 + $0x1a0] sm:$0xff]
    %v106 = vld [vmem:[#allocation5 + $0x1a8] sm:$0xff]
    %v107 = vld [vmem:[#allocation5 + $0x1b0] sm:$0xff]
    %v108 = vld [vmem:[#allocation5 + $0x1b8] sm:$0xff]
    %v109 = vld [vmem:[#allocation5 + $0x1c0] sm:$0xff]
    %v110 = vld [vmem:[#allocation5 + $0x1c8] sm:$0xff]
    %v111 = vld [vmem:[#allocation5 + $0x1d0] sm:$0xff]
    %v112 = vld [vmem:[#allocation5 + $0x1d8] sm:$0xff]
    %v113 = vld [vmem:[#allocation5 + $0x1e0] sm:$0xff]
    %v114 = vld [vmem:[#allocation5 + $0x1e8] sm:$0xff]
    %v115 = vld [vmem:[#allocation5 + $0x1f0] sm:$0xff]
    %v116 = vld [vmem:[#allocation5 + $0x1f8] sm:$0xff]
    %v117 = vld [vmem:[#allocation5 + $0x200] sm:$0xff]
    %v118 = vld [vmem:[#allocation5 + $0x208] sm:$0xff]
    %v119 = vld [vmem:[#allocation5 + $0x210] sm:$0xff]
    %v120 = vld [vmem:[#allocation5 + $0x218] sm:$0xff]
    %v121 = vld [vmem:[#allocation5 + $0x220] sm:$0xff]
    %v122 = vld [vmem:[#allocation5 + $0x228] sm:$0xff]
    %v123 = vld [vmem:[#allocation5 + $0x230] sm:$0xff]
    %v124 = vld [vmem:[#allocation5 + $0x238] sm:$0xff]
    %v125 = vld [vmem:[#allocation5 + $0x240] sm:$0xff]
    %v126 = vld [vmem:[#allocation5 + $0x248] sm:$0xff]
    %v127 = vld [vmem:[#allocation5 + $0x250] sm:$0xff]
    %v128 = vld [vmem:[#allocation5 + $0x258] sm:$0xff]
    %v129 = vld [vmem:[#allocation5 + $0x260] sm:$0xff]
    %v130 = vld [vmem:[#allocation5 + $0x268] sm:$0xff]
    %v131 = vld [vmem:[#allocation5 + $0x270] sm:$0xff]
    %v132 = vld [vmem:[#allocation5 + $0x278] sm:$0xff]
    %v133 = vld [vmem:[#allocation5 + $0x280] sm:$0xff]
    %v134 = vld [vmem:[#allocation5 + $0x288] sm:$0xff]
    %v135 = vld [vmem:[#allocation5 + $0x290] sm:$0xff]
    %v136 = vld [vmem:[#allocation5 + $0x298] sm:$0xff]
    %v137 = vld [vmem:[#allocation5 + $0x2a0] sm:$0xff]
    %v138 = vld [vmem:[#allocation5 + $0x2a8] sm:$0xff]
    %v139 = vld [vmem:[#allocation5 + $0x2b0] sm:$0xff]
    %v140 = vld [vmem:[#allocation5 + $0x2b8] sm:$0xff]
    %v141 = vld [vmem:[#allocation5 + $0x2c0] sm:$0xff]
    %v142 = vld [vmem:[#allocation5 + $0x2c8] sm:$0xff]
    %v143 = vld [vmem:[#allocation5 + $0x2d0] sm:$0xff]
    %v144 = vld [vmem:[#allocation5 + $0x2d8] sm:$0xff]
    %v145 = vld [vmem:[#allocation5 + $0x2e0] sm:$0xff]
    %v146 = vld [vmem:[#allocation5 + $0x2e8] sm:$0xff]
    %v147 = vld [vmem:[#allocation5 + $0x2f0] sm:$0xff]
    %v148 = vld [vmem:[#allocation5 + $0x2f8] sm:$0xff]
    %v149 = vld [vmem:[#allocation5 + $0x300] sm:$0xff]
    %v150 = vld [vmem:[#allocation5 + $0x308] sm:$0xff]
    %v151 = vld [vmem:[#allocation5 + $0x310] sm:$0xff]
    %v152 = vld [vmem:[#allocation5 + $0x318] sm:$0xff]
    %v153 = vld [vmem:[#allocation5 + $0x320] sm:$0xff]
    %v154 = vld [vmem:[#allocation5 + $0x328] sm:$0xff]
    %v155 = vld [vmem:[#allocation5 + $0x330] sm:$0xff]
    %v156 = vld [vmem:[#allocation5 + $0x338] sm:$0xff]
    %v157 = vld [vmem:[#allocation5 + $0x340] sm:$0xff]
    %v158 = vld [vmem:[#allocation5 + $0x348] sm:$0xff]
    %v159 = vld [vmem:[#allocation5 + $0x350] sm:$0xff]
    %v160 = vld [vmem:[#allocation5 + $0x358] sm:$0xff]
    %v161 = vld [vmem:[#allocation5 + $0x360] sm:$0xff]
    %v162 = vld [vmem:[#allocation5 + $0x368] sm:$0xff]
    %v163 = vld [vmem:[#allocation5 + $0x370] sm:$0xff]
    %v164 = vld [vmem:[#allocation5 + $0x378] sm:$0xff]
    %v165 = vld [vmem:[#allocation5 + $0x380] sm:$0xff]
    %v166 = vld [vmem:[#allocation5 + $0x388] sm:$0xff]
    %v167 = vld [vmem:[#allocation5 + $0x390] sm:$0xff]
    %v168 = vld [vmem:[#allocation5 + $0x398] sm:$0xff]
    %v169 = vld [vmem:[#allocation5 + $0x3a0] sm:$0xff]
    %v170 = vld [vmem:[#allocation5 + $0x3a8] sm:$0xff]
    %v171 = vld [vmem:[#allocation5 + $0x3b0] sm:$0xff]
    %v172 = vld [vmem:[#allocation5 + $0x3b8] sm:$0xff]
    %v173 = vld [vmem:[#allocation5 + $0x3c0] sm:$0xff]
    %v174 = vld [vmem:[#allocation5 + $0x3c8] sm:$0xff]
    %v175 = vld [vmem:[#allocation5 + $0x3d0] sm:$0xff]
    %v176 = vld [vmem:[#allocation5 + $0x3d8] sm:$0xff]
    %v177 = vld [vmem:[#allocation5 + $0x3e0] sm:$0xff]
    %v178 = vld [vmem:[#allocation5 + $0x3e8] sm:$0xff]
    %v179 = vld [vmem:[#allocation5 + $0x3f0] sm:$0xff]
    %v180 = vld [vmem:[#allocation5 + $0x3f8] sm:$0xff]
    %v181 = vld [vmem:[#allocation7] sm:$0xff]
    %v183 = vlaneseq
    %v184 = vshrl.u32 %v183, 7
    %v185 = vsub.s32 0, %v184
    %v186 = vrot.slane %v181, %v185
    %v187 = vlaneseq
    %v188 = vshrl.u32 %v187, 7
    %v189 = vsub.s32 1, %v188
    %v190 = vrot.slane %v181, %v189
    %v191 = vlaneseq
    %v192 = vshrl.u32 %v191, 7
    %v193 = vsub.s32 2, %v192
    %v194 = vrot.slane %v181, %v193
    %v195 = vlaneseq
    %v196 = vshrl.u32 %v195, 7
    %v197 = vsub.s32 3, %v196
    %v198 = vrot.slane %v181, %v197
    %v199 = vlaneseq
    %v200 = vshrl.u32 %v199, 7
    %v201 = vsub.s32 4, %v200
    %v202 = vrot.slane %v181, %v201
    %v203 = vlaneseq
    %v204 = vshrl.u32 %v203, 7
    %v205 = vsub.s32 5, %v204
    %v206 = vrot.slane %v181, %v205
    %v207 = vlaneseq
    %v208 = vshrl.u32 %v207, 7
    %v209 = vsub.s32 6, %v208
    %v210 = vrot.slane %v181, %v209
    %v211 = vlaneseq
    %v212 = vshrl.u32 %v211, 7
    %v213 = vsub.s32 7, %v212
    %v214 = vrot.slane %v181, %v213
    %223 = vmatprep.subr.mxu0 %v54
    %224 = vmatpush1.msra.mxu0 %v53
    %225 = vmatprep.subr.mxu0 %v62
    %226 = vmatpush1.msra.mxu0 %v61
    %227 = vmatprep.subr.mxu0 %v70
    %228 = vmatpush1.msra.mxu0 %v69
    %229 = vmatprep.subr.mxu0 %v78
    %230 = vmatpush1.msra.mxu0 %v77
    %231 = vmatprep.subr.mxu0 %v86
    %232 = vmatpush1.msra.mxu0 %v85
    %233 = vmatprep.subr.mxu0 %v94
    %234 = vmatpush1.msra.mxu0 %v93
    %235 = vmatprep.subr.mxu0 %v102
    %236 = vmatpush1.msra.mxu0 %v101
    %237 = vmatprep.subr.mxu0 %v110
    %238 = vmatpush1.msra.mxu0 %v109
    %239 = vmatprep.subr.mxu0 %v118
    %240 = vmatpush1.msra.mxu0 %v117
    %241 = vmatprep.subr.mxu0 %v126
    %242 = vmatpush1.msra.mxu0 %v125
    %243 = vmatprep.subr.mxu0 %v134
    %244 = vmatpush1.msra.mxu0 %v133
    %245 = vmatprep.subr.mxu0 %v142
    %246 = vmatpush1.msra.mxu0 %v141
    %247 = vmatprep.subr.mxu0 %v150
    %248 = vmatpush1.msra.mxu0 %v149
    %249 = vmatprep.subr.mxu0 %v158
    %250 = vmatpush1.msra.mxu0 %v157
    %251 = vmatprep.subr.mxu0 %v166
    %252 = vmatpush1.msra.mxu0 %v165
    %253 = vmatprep.subr.mxu0 %v174
    %254 = vmatpush1.msra.mxu0 %v173
    %255 = vmatprep.subr.mxu0 0.0
    %256 = vmatpush1.msra.mxu0 0.0
    %257 = vmatprep.subr.mxu0 0.0
    %258 = vmatpush1.msra.mxu0 0.0
    %259 = vmatprep.subr.mxu0 0.0
    %260 = vmatpush1.msra.mxu0 0.0
    %261 = vmatprep.subr.mxu0 0.0
    %262 = vmatpush1.msra.mxu0 0.0
    %263 = vmatprep.subr.mxu0 0.0
    %264 = vmatpush1.msra.mxu0 0.0
    %265 = vmatprep.subr.mxu0 0.0
    %266 = vmatpush1.msra.mxu0 0.0
    %267 = vmatprep.subr.mxu0 0.0
    %268 = vmatpush1.msra.mxu0 0.0
    %269 = vmatprep.subr.mxu0 0.0
    %270 = vmatpush1.msra.mxu0 0.0
    %271 = vmatprep.subr.mxu0 0.0
    %272 = vmatpush1.msra.mxu0 0.0
    %273 = vmatprep.subr.mxu0 0.0
    %274 = vmatpush1.msra.mxu0 0.0
    %275 = vmatprep.subr.mxu0 0.0
    %276 = vmatpush1.msra.mxu0 0.0
    %277 = vmatprep.subr.mxu0 0.0
    %278 = vmatpush1.msra.mxu0 0.0
    %279 = vmatprep.subr.mxu0 0.0
    %280 = vmatpush1.msra.mxu0 0.0
    %281 = vmatprep.subr.mxu0 0.0
    %282 = vmatpush1.msra.mxu0 0.0
    %283 = vmatprep.subr.mxu0 0.0
    %284 = vmatpush1.msra.mxu0 0.0
    %285 = vmatprep.subr.mxu0 0.0
    %286 = vmatpush1.msra.mxu0 0.0
    %287 = vmatprep.mubr.f32.mxu0 0.0
    %288 = vmatmul.mubr.f32.gmra.mrb[0].mxu0 %v52
    %v289 = vpop.f32.mrb[0].mxu0
    %v290 = vadd.f32 %v186, %v289
    %v291 = vpop.f32.mrb[0].mxu0
    %v292 = vadd.f32 %v190, %v291
    %293 = vdwg.mxu0
    %294 = vmatprep.subr.mxu0 %v56
    %295 = vmatpush1.msra.mxu0 %v55
    %296 = vmatprep.subr.mxu0 %v64
    %297 = vmatpush1.msra.mxu0 %v63
    %298 = vmatprep.subr.mxu0 %v72
    %299 = vmatpush1.msra.mxu0 %v71
    %300 = vmatprep.subr.mxu0 %v80
    %301 = vmatpush1.msra.mxu0 %v79
    %302 = vmatprep.subr.mxu0 %v88
    %303 = vmatpush1.msra.mxu0 %v87
    %304 = vmatprep.subr.mxu0 %v96
    %305 = vmatpush1.msra.mxu0 %v95
    %306 = vmatprep.subr.mxu0 %v104
    %307 = vmatpush1.msra.mxu0 %v103
    %308 = vmatprep.subr.mxu0 %v112
    %309 = vmatpush1.msra.mxu0 %v111
    %310 = vmatprep.subr.mxu0 %v120
    %311 = vmatpush1.msra.mxu0 %v119
    %312 = vmatprep.subr.mxu0 %v128
    %313 = vmatpush1.msra.mxu0 %v127
    %314 = vmatprep.subr.mxu0 %v136
    %315 = vmatpush1.msra.mxu0 %v135
    %316 = vmatprep.subr.mxu0 %v144
    %317 = vmatpush1.msra.mxu0 %v143
    %318 = vmatprep.subr.mxu0 %v152
    %319 = vmatpush1.msra.mxu0 %v151
    %320 = vmatprep.subr.mxu0 %v160
    %321 = vmatpush1.msra.mxu0 %v159
    %322 = vmatprep.subr.mxu0 %v168
    %323 = vmatpush1.msra.mxu0 %v167
    %324 = vmatprep.subr.mxu0 %v176
    %325 = vmatpush1.msra.mxu0 %v175
    %326 = vmatprep.subr.mxu0 0.0
    %327 = vmatpush1.msra.mxu0 0.0
    %328 = vmatprep.subr.mxu0 0.0
    %329 = vmatpush1.msra.mxu0 0.0
    %330 = vmatprep.subr.mxu0 0.0
    %331 = vmatpush1.msra.mxu0 0.0
    %332 = vmatprep.subr.mxu0 0.0
    %333 = vmatpush1.msra.mxu0 0.0
    %334 = vmatprep.subr.mxu0 0.0
    %335 = vmatpush1.msra.mxu0 0.0
    %336 = vmatprep.subr.mxu0 0.0
    %337 = vmatpush1.msra.mxu0 0.0
    %338 = vmatprep.subr.mxu0 0.0
    %339 = vmatpush1.msra.mxu0 0.0
    %340 = vmatprep.subr.mxu0 0.0
    %341 = vmatpush1.msra.mxu0 0.0
    %342 = vmatprep.subr.mxu0 0.0
    %343 = vmatpush1.msra.mxu0 0.0
    %344 = vmatprep.subr.mxu0 0.0
    %345 = vmatpush1.msra.mxu0 0.0
    %346 = vmatprep.subr.mxu0 0.0
    %347 = vmatpush1.msra.mxu0 0.0
    %348 = vmatprep.subr.mxu0 0.0
    %349 = vmatpush1.msra.mxu0 0.0
    %350 = vmatprep.subr.mxu0 0.0
    %351 = vmatpush1.msra.mxu0 0.0
    %352 = vmatprep.subr.mxu0 0.0
    %353 = vmatpush1.msra.mxu0 0.0
    %354 = vmatprep.subr.mxu0 0.0
    %355 = vmatpush1.msra.mxu0 0.0
    %356 = vmatprep.subr.mxu0 0.0
    %357 = vmatpush1.msra.mxu0 0.0
    %358 = vmatprep.mubr.f32.mxu0 0.0
    %359 = vmatmul.mubr.f32.gmra.mrb[0].mxu0 %v52
    %v360 = vpop.f32.mrb[0].mxu0
    %v361 = vadd.f32 %v194, %v360
    %v362 = vpop.f32.mrb[0].mxu0
    %v363 = vadd.f32 %v198, %v362
    %364 = vdwg.mxu0
    %365 = vmatprep.subr.mxu0 %v58
    %366 = vmatpush1.msra.mxu0 %v57
    %367 = vmatprep.subr.mxu0 %v66
    %368 = vmatpush1.msra.mxu0 %v65
    %369 = vmatprep.subr.mxu0 %v74
    %370 = vmatpush1.msra.mxu0 %v73
    %371 = vmatprep.subr.mxu0 %v82
    %372 = vmatpush1.msra.mxu0 %v81
    %373 = vmatprep.subr.mxu0 %v90
    %374 = vmatpush1.msra.mxu0 %v89
    %375 = vmatprep.subr.mxu0 %v98
    %376 = vmatpush1.msra.mxu0 %v97
    %377 = vmatprep.subr.mxu0 %v106
    %378 = vmatpush1.msra.mxu0 %v105
    %379 = vmatprep.subr.mxu0 %v114
    %380 = vmatpush1.msra.mxu0 %v113
    %381 = vmatprep.subr.mxu0 %v122
    %382 = vmatpush1.msra.mxu0 %v121
    %383 = vmatprep.subr.mxu0 %v130
    %384 = vmatpush1.msra.mxu0 %v129
    %385 = vmatprep.subr.mxu0 %v138
    %386 = vmatpush1.msra.mxu0 %v137
    %387 = vmatprep.subr.mxu0 %v146
    %388 = vmatpush1.msra.mxu0 %v145
    %389 = vmatprep.subr.mxu0 %v154
    %390 = vmatpush1.msra.mxu0 %v153
    %391 = vmatprep.subr.mxu0 %v162
    %392 = vmatpush1.msra.mxu0 %v161
    %393 = vmatprep.subr.mxu0 %v170
    %394 = vmatpush1.msra.mxu0 %v169
    %395 = vmatprep.subr.mxu0 %v178
    %396 = vmatpush1.msra.mxu0 %v177
    %397 = vmatprep.subr.mxu0 0.0
    %398 = vmatpush1.msra.mxu0 0.0
    %399 = vmatprep.subr.mxu0 0.0
    %400 = vmatpush1.msra.mxu0 0.0
    %401 = vmatprep.subr.mxu0 0.0
    %402 = vmatpush1.msra.mxu0 0.0
    %403 = vmatprep.subr.mxu0 0.0
    %404 = vmatpush1.msra.mxu0 0.0
    %405 = vmatprep.subr.mxu0 0.0
    %406 = vmatpush1.msra.mxu0 0.0
    %407 = vmatprep.subr.mxu0 0.0
    %408 = vmatpush1.msra.mxu0 0.0
    %409 = vmatprep.subr.mxu0 0.0
    %410 = vmatpush1.msra.mxu0 0.0
    %411 = vmatprep.subr.mxu0 0.0
    %412 = vmatpush1.msra.mxu0 0.0
    %413 = vmatprep.subr.mxu0 0.0
    %414 = vmatpush1.msra.mxu0 0.0
    %415 = vmatprep.subr.mxu0 0.0
    %416 = vmatpush1.msra.mxu0 0.0
    %417 = vmatprep.subr.mxu0 0.0
    %418 = vmatpush1.msra.mxu0 0.0
    %419 = vmatprep.subr.mxu0 0.0
    %420 = vmatpush1.msra.mxu0 0.0
    %421 = vmatprep.subr.mxu0 0.0
    %422 = vmatpush1.msra.mxu0 0.0
    %423 = vmatprep.subr.mxu0 0.0
    %424 = vmatpush1.msra.mxu0 0.0
    %425 = vmatprep.subr.mxu0 0.0
    %426 = vmatpush1.msra.mxu0 0.0
    %427 = vmatprep.subr.mxu0 0.0
    %428 = vmatpush1.msra.mxu0 0.0
    %429 = vmatprep.mubr.f32.mxu0 0.0
    %430 = vmatmul.mubr.f32.gmra.mrb[0].mxu0 %v52
    %v431 = vpop.f32.mrb[0].mxu0
    %v432 = vadd.f32 %v202, %v431
    %v433 = vpop.f32.mrb[0].mxu0
    %v434 = vadd.f32 %v206, %v433
    %435 = vdwg.mxu0
    %436 = vmatprep.subr.mxu0 %v60
    %437 = vmatpush1.msra.mxu0 %v59
    %438 = vmatprep.subr.mxu0 %v68
    %439 = vmatpush1.msra.mxu0 %v67
    %440 = vmatprep.subr.mxu0 %v76
    %441 = vmatpush1.msra.mxu0 %v75
    %442 = vmatprep.subr.mxu0 %v84
    %443 = vmatpush1.msra.mxu0 %v83
    %444 = vmatprep.subr.mxu0 %v92
    %445 = vmatpush1.msra.mxu0 %v91
    %446 = vmatprep.subr.mxu0 %v100
    %447 = vmatpush1.msra.mxu0 %v99
    %448 = vmatprep.subr.mxu0 %v108
    %449 = vmatpush1.msra.mxu0 %v107
    %450 = vmatprep.subr.mxu0 %v116
    %451 = vmatpush1.msra.mxu0 %v115
    %452 = vmatprep.subr.mxu0 %v124
    %453 = vmatpush1.msra.mxu0 %v123
    %454 = vmatprep.subr.mxu0 %v132
    %455 = vmatpush1.msra.mxu0 %v131
    %456 = vmatprep.subr.mxu0 %v140
    %457 = vmatpush1.msra.mxu0 %v139
    %458 = vmatprep.subr.mxu0 %v148
    %459 = vmatpush1.msra.mxu0 %v147
    %460 = vmatprep.subr.mxu0 %v156
    %461 = vmatpush1.msra.mxu0 %v155
    %462 = vmatprep.subr.mxu0 %v164
    %463 = vmatpush1.msra.mxu0 %v163
    %464 = vmatprep.subr.mxu0 %v172
    %465 = vmatpush1.msra.mxu0 %v171
    %466 = vmatprep.subr.mxu0 %v180
    %467 = vmatpush1.msra.mxu0 %v179
    %468 = vmatprep.subr.mxu0 0.0
    %469 = vmatpush1.msra.mxu0 0.0
    %470 = vmatprep.subr.mxu0 0.0
    %471 = vmatpush1.msra.mxu0 0.0
    %472 = vmatprep.subr.mxu0 0.0
    %473 = vmatpush1.msra.mxu0 0.0
    %474 = vmatprep.subr.mxu0 0.0
    %475 = vmatpush1.msra.mxu0 0.0
    %476 = vmatprep.subr.mxu0 0.0
    %477 = vmatpush1.msra.mxu0 0.0
    %478 = vmatprep.subr.mxu0 0.0
    %479 = vmatpush1.msra.mxu0 0.0
    %480 = vmatprep.subr.mxu0 0.0
    %481 = vmatpush1.msra.mxu0 0.0
    %482 = vmatprep.subr.mxu0 0.0
    %483 = vmatpush1.msra.mxu0 0.0
    %484 = vmatprep.subr.mxu0 0.0
    %485 = vmatpush1.msra.mxu0 0.0
    %486 = vmatprep.subr.mxu0 0.0
    %487 = vmatpush1.msra.mxu0 0.0
    %488 = vmatprep.subr.mxu0 0.0
    %489 = vmatpush1.msra.mxu0 0.0
    %490 = vmatprep.subr.mxu0 0.0
    %491 = vmatpush1.msra.mxu0 0.0
    %492 = vmatprep.subr.mxu0 0.0
    %493 = vmatpush1.msra.mxu0 0.0
    %494 = vmatprep.subr.mxu0 0.0
    %495 = vmatpush1.msra.mxu0 0.0
    %496 = vmatprep.subr.mxu0 0.0
    %497 = vmatpush1.msra.mxu0 0.0
    %498 = vmatprep.subr.mxu0 0.0
    %499 = vmatpush1.msra.mxu0 0.0
    %500 = vmatprep.mubr.f32.mxu0 0.0
    %501 = vmatmul.mubr.f32.gmra.mrb[0].mxu0 %v52
    %v502 = vpop.f32.mrb[0].mxu0
    %v503 = vadd.f32 %v210, %v502
    %v504 = vpop.f32.mrb[0].mxu0
    %v505 = vadd.f32 %v214, %v504
    %506 = vdwg.mxu0
    %v507 = vlaneseq
    %v508 = vand.u32 %v507, 127
    %v509 = vadd.s32 %v508, 128
    %v510 = vadd.s32 %v508, 256
    %v511 = vadd.s32 %v508, 384
    %v512 = vadd.s32 %v508, 512
    %v513 = vadd.s32 %v508, 640
    %v514 = vadd.s32 %v508, 768
    %v515 = vadd.s32 %v508, 896
    %v516 = vand.u32 %v508, 31
    %v517 = vand.u32 %v509, 31
    %v518 = vand.u32 %v510, 31
    %v519 = vand.u32 %v511, 31
    %v520 = vand.u32 %v512, 31
    %v521 = vand.u32 %v513, 31
    %v522 = vand.u32 %v514, 31
    %v523 = vand.u32 %v515, 31
    %vm524 = vcmp.eq.s32.totalorder %v516, 31
    %vm525 = vcmp.eq.s32.totalorder %v517, 31
    %vm526 = vcmp.eq.s32.totalorder %v518, 31
    %vm527 = vcmp.eq.s32.totalorder %v519, 31
    %vm528 = vcmp.eq.s32.totalorder %v520, 31
    %vm529 = vcmp.eq.s32.totalorder %v521, 31
    %vm530 = vcmp.eq.s32.totalorder %v522, 31
    %vm531 = vcmp.eq.s32.totalorder %v523, 31
    %v532 = vand.u32 2147483647, %v290
    %vm533 = vcmp.le.f32.partialorder %v532, 0.7853982
    %vm534 = vcmp.lt.s32.totalorder %v290, 0
    %v535 = vand.u32 %v290, 2139095040
    %v536 = vshrl.u32 %v535, 23
    %v537 = vsub.s32 %v536, 127
    %v538 = vand.u32 2147483647, %v290
    %v539 = vand.u32 %v538, 8388607
    %v540 = vor.u32 %v539, 8388608
    %v541 = vsub.s32 0, %v540
    %v542 = vadd.s32 %v537, 1
    %vm543 = vcmp.gt.s32.totalorder %v542, 0
    %v544 = vsel %vm543, %v542, 0
    %v545 = vshrl.u32 %v544, 5
    %v546 = vand.u32 %v544, 31
    %v547 = vsub.s32 32, %v546
    %v548 = vshrl.u32 683565275, %v547
    %v549 = vshll.u32 683565275, %v546
    %v550 = vshrl.u32 2475754826, %v547
    %v551 = vor.u32 %v549, %v550
    %v552 = vshll.u32 2475754826, %v546
    %v553 = vshrl.u32 2131351028, %v547
    %v554 = vor.u32 %v552, %v553
    %v555 = vshll.u32 2131351028, %v546
    %v556 = vshrl.u32 2102212464, %v547
    %v557 = vor.u32 %v555, %v556
    %v558 = vshll.u32 2102212464, %v546
    %v559 = vshrl.u32 920167782, %v547
    %v560 = vor.u32 %v558, %v559
    %v561 = vshll.u32 920167782, %v546
    %v562 = vshrl.u32 1326507024, %v547
    %v563 = vor.u32 %v561, %v562
    %vm564 = vcmp.lt.s32.totalorder %v545, 1
    %vm565 = vcmp.lt.s32.totalorder %v545, 2
    %vm566 = vcmp.lt.s32.totalorder %v545, 3
    %vm567 = vcmp.lt.s32.totalorder %v545, 4
    %v568 = vsel %vm564, %v548, %v551
    %v569 = vsel %vm567, %v557, 2102212464
    %v570 = vsel %vm566, %v554, %v569
    %v571 = vsel %vm565, %v568, %v570
    %v572 = vsel %vm564, %v551, %v554
    %v573 = vsel %vm567, %v560, 920167782
    %v574 = vsel %vm566, %v557, %v573
    %v575 = vsel %vm565, %v572, %v574
    %v576 = vsel %vm564, %v554, %v557
    %v577 = vsel %vm567, %v563, 1326507024
    %v578 = vsel %vm566, %v560, %v577
    %v579 = vsel %vm565, %v576, %v578
    %v580 = vshll.u32 %v540, 8
    %v581 = vmul.u32.u64.compose %v580, %v579
    %v582 = vextract.low.u32 %v581
    %v583 = vextract.high.u32 %v581
    %v584 = vmul.u32.u64.compose %v580, %v575
    %v585 = vextract.low.u32 %v584
    %v586 = vextract.high.u32 %v584
    %v587 = vmul.u32 %v580, %v571
    %v588 = vadd.s32 %v583, %v585
    %vm589 = vc.u32 %v583, %v585
    %v590 = vadd.s32 %v586, 1
    %v591 = vsel %vm589, %v590, %v586
    %v592 = vadd.s32 %v587, %v591
    %v593 = vadd.s32 %v592, 536870912
    %v594 = vshrl.u32 %v593, 30
    %v595 = vshll.u32 %v594, 30
    %v596 = vsub.s32 %v592, %v595
    %vm597 = vcmp.lt.s32.totalorder %v596, 0
    %v598 = vsub.s32 0, %v596
    %v599 = vsel %vm597, %v598, %v596
    %v600 = vclz %v599
    %v601 = vsub.s32 %v600, 2
    %vm602 = vcmp.gt.s32.totalorder 0, %v601
    %v603 = vsel %vm602, 0, %v601
    %v604 = vsub.s32 32, %v603
    %v605 = vshll.u32 %v596, %v603
    %v606 = vshrl.u32 %v588, %v604
    %v607 = vor.u32 %v605, %v606
    %v608 = vsub.s32 4294967266, %v603
    %v609 = vadd.s32 %v608, 127
    %v610 = vshll.u32 %v609, 23
    %v611 = vor.u32 4788187, %v610
    %v612 = vand.u32 2147483647, %v611
    %v614 = vcvt.s32.f32 %v607
    %v615 = vmul.f32 %v614, %v612
    %v616 = vxor.u32 %v615, 2147483648
    %v617 = vsel %vm534, %v616, %v615
    %v618 = vsub.s32 4, %v594
    %v619 = vsel %vm534, %v618, %v594
    %v620 = vsel %vm533, %v290, %v617
    %v621 = vsel %vm533, 0, %v619
    %v622 = vcosq.f32.pop %v620
    %v623 = vsinq.f32.pop %v620
    %vm624 = vweird.f32 %v290
    %v625 = vadd.s32 %v621, 3
    %v626 = vand.u32 %v625, 3
    %vm627 = vcmp.lt.s32.totalorder %v626, 2
    %vm628 = vcmp.eq.s32.totalorder %v626, 0
    %v629 = vxor.u32 %v623, 2147483648
    %v630 = vsel %vm628, %v622, %v629
    %vm631 = vcmp.eq.s32.totalorder %v626, 2
    %v632 = vxor.u32 %v622, 2147483648
    %v633 = vsel %vm631, %v632, %v623
    %v634 = vsel %vm627, %v630, %v633
    %v635 = vsel %vm624, nan, %v634
    %v636 = vand.u32 2147483647, %v292
    %vm637 = vcmp.le.f32.partialorder %v636, 0.7853982
    %vm638 = vcmp.lt.s32.totalorder %v292, 0
    %v639 = vand.u32 %v292, 2139095040
    %v640 = vshrl.u32 %v639, 23
    %v641 = vsub.s32 %v640, 127
    %v642 = vand.u32 2147483647, %v292
    %v643 = vand.u32 %v642, 8388607
    %v644 = vor.u32 %v643, 8388608
    %v645 = vsub.s32 0, %v644
    %v646 = vadd.s32 %v641, 1
    %vm647 = vcmp.gt.s32.totalorder %v646, 0
    %v648 = vsel %vm647, %v646, 0
    %v649 = vshrl.u32 %v648, 5
    %v650 = vand.u32 %v648, 31
    %v651 = vsub.s32 32, %v650
    %v652 = vshrl.u32 683565275, %v651
    %v653 = vshll.u32 683565275, %v650
    %v654 = vshrl.u32 2475754826, %v651
    %v655 = vor.u32 %v653, %v654
    %v656 = vshll.u32 2475754826, %v650
    %v657 = vshrl.u32 2131351028, %v651
    %v658 = vor.u32 %v656, %v657
    %v659 = vshll.u32 2131351028, %v650
    %v660 = vshrl.u32 2102212464, %v651
    %v661 = vor.u32 %v659, %v660
    %v662 = vshll.u32 2102212464, %v650
    %v663 = vshrl.u32 920167782, %v651
    %v664 = vor.u32 %v662, %v663
    %v665 = vshll.u32 920167782, %v650
    %v666 = vshrl.u32 1326507024, %v651
    %v667 = vor.u32 %v665, %v666
    %vm668 = vcmp.lt.s32.totalorder %v649, 1
    %vm669 = vcmp.lt.s32.totalorder %v649, 2
    %vm670 = vcmp.lt.s32.totalorder %v649, 3
    %vm671 = vcmp.lt.s32.totalorder %v649, 4
    %v672 = vsel %vm668, %v652, %v655
    %v673 = vsel %vm671, %v661, 2102212464
    %v674 = vsel %vm670, %v658, %v673
    %v675 = vsel %vm669, %v672, %v674
    %v676 = vsel %vm668, %v655, %v658
    %v677 = vsel %vm671, %v664, 920167782
    %v678 = vsel %vm670, %v661, %v677
    %v679 = vsel %vm669, %v676, %v678
    %v680 = vsel %vm668, %v658, %v661
    %v681 = vsel %vm671, %v667, 1326507024
    %v682 = vsel %vm670, %v664, %v681
    %v683 = vsel %vm669, %v680, %v682
    %v684 = vshll.u32 %v644, 8
    %v685 = vmul.u32.u64.compose %v684, %v683
    %v686 = vextract.low.u32 %v685
    %v687 = vextract.high.u32 %v685
    %v688 = vmul.u32.u64.compose %v684, %v679
    %v689 = vextract.low.u32 %v688
    %v690 = vextract.high.u32 %v688
    %v691 = vmul.u32 %v684, %v675
    %v692 = vadd.s32 %v687, %v689
    %vm693 = vc.u32 %v687, %v689
    %v694 = vadd.s32 %v690, 1
    %v695 = vsel %vm693, %v694, %v690
    %v696 = vadd.s32 %v691, %v695
    %v697 = vadd.s32 %v696, 536870912
    %v698 = vshrl.u32 %v697, 30
    %v699 = vshll.u32 %v698, 30
    %v700 = vsub.s32 %v696, %v699
    %vm701 = vcmp.lt.s32.totalorder %v700, 0
    %v702 = vsub.s32 0, %v700
    %v703 = vsel %vm701, %v702, %v700
    %v704 = vclz %v703
    %v705 = vsub.s32 %v704, 2
    %vm706 = vcmp.gt.s32.totalorder 0, %v705
    %v707 = vsel %vm706, 0, %v705
    %v708 = vsub.s32 32, %v707
    %v709 = vshll.u32 %v700, %v707
    %v710 = vshrl.u32 %v692, %v708
    %v711 = vor.u32 %v709, %v710
    %v712 = vsub.s32 4294967266, %v707
    %v713 = vadd.s32 %v712, 127
    %v714 = vshll.u32 %v713, 23
    %v715 = vor.u32 4788187, %v714
    %v716 = vand.u32 2147483647, %v715
    %v718 = vcvt.s32.f32 %v711
    %v719 = vmul.f32 %v718, %v716
    %v720 = vxor.u32 %v719, 2147483648
    %v721 = vsel %vm638, %v720, %v719
    %v722 = vsub.s32 4, %v698
    %v723 = vsel %vm638, %v722, %v698
    %v724 = vsel %vm637, %v292, %v721
    %v725 = vsel %vm637, 0, %v723
    %v726 = vcosq.f32.pop %v724
    %v727 = vsinq.f32.pop %v724
    %vm728 = vweird.f32 %v292
    %v729 = vadd.s32 %v725, 3
    %v730 = vand.u32 %v729, 3
    %vm731 = vcmp.lt.s32.totalorder %v730, 2
    %vm732 = vcmp.eq.s32.totalorder %v730, 0
    %v733 = vxor.u32 %v727, 2147483648
    %v734 = vsel %vm732, %v726, %v733
    %vm735 = vcmp.eq.s32.totalorder %v730, 2
    %v736 = vxor.u32 %v726, 2147483648
    %v737 = vsel %vm735, %v736, %v727
    %v738 = vsel %vm731, %v734, %v737
    %v739 = vsel %vm728, nan, %v738
    %v740 = vand.u32 2147483647, %v361
    %vm741 = vcmp.le.f32.partialorder %v740, 0.7853982
    %vm742 = vcmp.lt.s32.totalorder %v361, 0
    %v743 = vand.u32 %v361, 2139095040
    %v744 = vshrl.u32 %v743, 23
    %v745 = vsub.s32 %v744, 127
    %v746 = vand.u32 2147483647, %v361
    %v747 = vand.u32 %v746, 8388607
    %v748 = vor.u32 %v747, 8388608
    %v749 = vsub.s32 0, %v748
    %v750 = vadd.s32 %v745, 1
    %vm751 = vcmp.gt.s32.totalorder %v750, 0
    %v752 = vsel %vm751, %v750, 0
    %v753 = vshrl.u32 %v752, 5
    %v754 = vand.u32 %v752, 31
    %v755 = vsub.s32 32, %v754
    %v756 = vshrl.u32 683565275, %v755
    %v757 = vshll.u32 683565275, %v754
    %v758 = vshrl.u32 2475754826, %v755
    %v759 = vor.u32 %v757, %v758
    %v760 = vshll.u32 2475754826, %v754
    %v761 = vshrl.u32 2131351028, %v755
    %v762 = vor.u32 %v760, %v761
    %v763 = vshll.u32 2131351028, %v754
    %v764 = vshrl.u32 2102212464, %v755
    %v765 = vor.u32 %v763, %v764
    %v766 = vshll.u32 2102212464, %v754
    %v767 = vshrl.u32 920167782, %v755
    %v768 = vor.u32 %v766, %v767
    %v769 = vshll.u32 920167782, %v754
    %v770 = vshrl.u32 1326507024, %v755
    %v771 = vor.u32 %v769, %v770
    %vm772 = vcmp.lt.s32.totalorder %v753, 1
    %vm773 = vcmp.lt.s32.totalorder %v753, 2
    %vm774 = vcmp.lt.s32.totalorder %v753, 3
    %vm775 = vcmp.lt.s32.totalorder %v753, 4
    %v776 = vsel %vm772, %v756, %v759
    %v777 = vsel %vm775, %v765, 2102212464
    %v778 = vsel %vm774, %v762, %v777
    %v779 = vsel %vm773, %v776, %v778
    %v780 = vsel %vm772, %v759, %v762
    %v781 = vsel %vm775, %v768, 920167782
    %v782 = vsel %vm774, %v765, %v781
    %v783 = vsel %vm773, %v780, %v782
    %v784 = vsel %vm772, %v762, %v765
    %v785 = vsel %vm775, %v771, 1326507024
    %v786 = vsel %vm774, %v768, %v785
    %v787 = vsel %vm773, %v784, %v786
    %v788 = vshll.u32 %v748, 8
    %v789 = vmul.u32.u64.compose %v788, %v787
    %v790 = vextract.low.u32 %v789
    %v791 = vextract.high.u32 %v789
    %v792 = vmul.u32.u64.compose %v788, %v783
    %v793 = vextract.low.u32 %v792
    %v794 = vextract.high.u32 %v792
    %v795 = vmul.u32 %v788, %v779
    %v796 = vadd.s32 %v791, %v793
    %vm797 = vc.u32 %v791, %v793
    %v798 = vadd.s32 %v794, 1
    %v799 = vsel %vm797, %v798, %v794
    %v800 = vadd.s32 %v795, %v799
    %v801 = vadd.s32 %v800, 536870912
    %v802 = vshrl.u32 %v801, 30
    %v803 = vshll.u32 %v802, 30
    %v804 = vsub.s32 %v800, %v803
    %vm805 = vcmp.lt.s32.totalorder %v804, 0
    %v806 = vsub.s32 0, %v804
    %v807 = vsel %vm805, %v806, %v804
    %v808 = vclz %v807
    %v809 = vsub.s32 %v808, 2
    %vm810 = vcmp.gt.s32.totalorder 0, %v809
    %v811 = vsel %vm810, 0, %v809
    %v812 = vsub.s32 32, %v811
    %v813 = vshll.u32 %v804, %v811
    %v814 = vshrl.u32 %v796, %v812
    %v815 = vor.u32 %v813, %v814
    %v816 = vsub.s32 4294967266, %v811
    %v817 = vadd.s32 %v816, 127
    %v818 = vshll.u32 %v817, 23
    %v819 = vor.u32 4788187, %v818
    %v820 = vand.u32 2147483647, %v819
    %v822 = vcvt.s32.f32 %v815
    %v823 = vmul.f32 %v822, %v820
    %v824 = vxor.u32 %v823, 2147483648
    %v825 = vsel %vm742, %v824, %v823
    %v826 = vsub.s32 4, %v802
    %v827 = vsel %vm742, %v826, %v802
    %v828 = vsel %vm741, %v361, %v825
    %v829 = vsel %vm741, 0, %v827
    %v830 = vcosq.f32.pop %v828
    %v831 = vsinq.f32.pop %v828
    %vm832 = vweird.f32 %v361
    %v833 = vadd.s32 %v829, 3
    %v834 = vand.u32 %v833, 3
    %vm835 = vcmp.lt.s32.totalorder %v834, 2
    %vm836 = vcmp.eq.s32.totalorder %v834, 0
    %v837 = vxor.u32 %v831, 2147483648
    %v838 = vsel %vm836, %v830, %v837
    %vm839 = vcmp.eq.s32.totalorder %v834, 2
    %v840 = vxor.u32 %v830, 2147483648
    %v841 = vsel %vm839, %v840, %v831
    %v842 = vsel %vm835, %v838, %v841
    %v843 = vsel %vm832, nan, %v842
    %v844 = vand.u32 2147483647, %v363
    %vm845 = vcmp.le.f32.partialorder %v844, 0.7853982
    %vm846 = vcmp.lt.s32.totalorder %v363, 0
    %v847 = vand.u32 %v363, 2139095040
    %v848 = vshrl.u32 %v847, 23
    %v849 = vsub.s32 %v848, 127
    %v850 = vand.u32 2147483647, %v363
    %v851 = vand.u32 %v850, 8388607
    %v852 = vor.u32 %v851, 8388608
    %v853 = vsub.s32 0, %v852
    %v854 = vadd.s32 %v849, 1
    %vm855 = vcmp.gt.s32.totalorder %v854, 0
    %v856 = vsel %vm855, %v854, 0
    %v857 = vshrl.u32 %v856, 5
    %v858 = vand.u32 %v856, 31
    %v859 = vsub.s32 32, %v858
    %v860 = vshrl.u32 683565275, %v859
    %v861 = vshll.u32 683565275, %v858
    %v862 = vshrl.u32 2475754826, %v859
    %v863 = vor.u32 %v861, %v862
    %v864 = vshll.u32 2475754826, %v858
    %v865 = vshrl.u32 2131351028, %v859
    %v866 = vor.u32 %v864, %v865
    %v867 = vshll.u32 2131351028, %v858
    %v868 = vshrl.u32 2102212464, %v859
    %v869 = vor.u32 %v867, %v868
    %v870 = vshll.u32 2102212464, %v858
    %v871 = vshrl.u32 920167782, %v859
    %v872 = vor.u32 %v870, %v871
    %v873 = vshll.u32 920167782, %v858
    %v874 = vshrl.u32 1326507024, %v859
    %v875 = vor.u32 %v873, %v874
    %vm876 = vcmp.lt.s32.totalorder %v857, 1
    %vm877 = vcmp.lt.s32.totalorder %v857, 2
    %vm878 = vcmp.lt.s32.totalorder %v857, 3
    %vm879 = vcmp.lt.s32.totalorder %v857, 4
    %v880 = vsel %vm876, %v860, %v863
    %v881 = vsel %vm879, %v869, 2102212464
    %v882 = vsel %vm878, %v866, %v881
    %v883 = vsel %vm877, %v880, %v882
    %v884 = vsel %vm876, %v863, %v866
    %v885 = vsel %vm879, %v872, 920167782
    %v886 = vsel %vm878, %v869, %v885
    %v887 = vsel %vm877, %v884, %v886
    %v888 = vsel %vm876, %v866, %v869
    %v889 = vsel %vm879, %v875, 1326507024
    %v890 = vsel %vm878, %v872, %v889
    %v891 = vsel %vm877, %v888, %v890
    %v892 = vshll.u32 %v852, 8
    %v893 = vmul.u32.u64.compose %v892, %v891
    %v894 = vextract.low.u32 %v893
    %v895 = vextract.high.u32 %v893
    %v896 = vmul.u32.u64.compose %v892, %v887
    %v897 = vextract.low.u32 %v896
    %v898 = vextract.high.u32 %v896
    %v899 = vmul.u32 %v892, %v883
    %v900 = vadd.s32 %v895, %v897
    %vm901 = vc.u32 %v895, %v897
    %v902 = vadd.s32 %v898, 1
    %v903 = vsel %vm901, %v902, %v898
    %v904 = vadd.s32 %v899, %v903
    %v905 = vadd.s32 %v904, 536870912
    %v906 = vshrl.u32 %v905, 30
    %v907 = vshll.u32 %v906, 30
    %v908 = vsub.s32 %v904, %v907
    %vm909 = vcmp.lt.s32.totalorder %v908, 0
    %v910 = vsub.s32 0, %v908
    %v911 = vsel %vm909, %v910, %v908
    %v912 = vclz %v911
    %v913 = vsub.s32 %v912, 2
    %vm914 = vcmp.gt.s32.totalorder 0, %v913
    %v915 = vsel %vm914, 0, %v913
    %v916 = vsub.s32 32, %v915
    %v917 = vshll.u32 %v908, %v915
    %v918 = vshrl.u32 %v900, %v916
    %v919 = vor.u32 %v917, %v918
    %v920 = vsub.s32 4294967266, %v915
    %v921 = vadd.s32 %v920, 127
    %v922 = vshll.u32 %v921, 23
    %v923 = vor.u32 4788187, %v922
    %v924 = vand.u32 2147483647, %v923
    %v926 = vcvt.s32.f32 %v919
    %v927 = vmul.f32 %v926, %v924
    %v928 = vxor.u32 %v927, 2147483648
    %v929 = vsel %vm846, %v928, %v927
    %v930 = vsub.s32 4, %v906
    %v931 = vsel %vm846, %v930, %v906
    %v932 = vsel %vm845, %v363, %v929
    %v933 = vsel %vm845, 0, %v931
    %v934 = vcosq.f32.pop %v932
    %v935 = vsinq.f32.pop %v932
    %vm936 = vweird.f32 %v363
    %v937 = vadd.s32 %v933, 3
    %v938 = vand.u32 %v937, 3
    %vm939 = vcmp.lt.s32.totalorder %v938, 2
    %vm940 = vcmp.eq.s32.totalorder %v938, 0
    %v941 = vxor.u32 %v935, 2147483648
    %v942 = vsel %vm940, %v934, %v941
    %vm943 = vcmp.eq.s32.totalorder %v938, 2
    %v944 = vxor.u32 %v934, 2147483648
    %v945 = vsel %vm943, %v944, %v935
    %v946 = vsel %vm939, %v942, %v945
    %v947 = vsel %vm936, nan, %v946
    %v948 = vand.u32 2147483647, %v432
    %vm949 = vcmp.le.f32.partialorder %v948, 0.7853982
    %vm950 = vcmp.lt.s32.totalorder %v432, 0
    %v951 = vand.u32 %v432, 2139095040
    %v952 = vshrl.u32 %v951, 23
    %v953 = vsub.s32 %v952, 127
    %v954 = vand.u32 2147483647, %v432
    %v955 = vand.u32 %v954, 8388607
    %v956 = vor.u32 %v955, 8388608
    %v957 = vsub.s32 0, %v956
    %v958 = vadd.s32 %v953, 1
    %vm959 = vcmp.gt.s32.totalorder %v958, 0
    %v960 = vsel %vm959, %v958, 0
    %v961 = vshrl.u32 %v960, 5
    %v962 = vand.u32 %v960, 31
    %v963 = vsub.s32 32, %v962
    %v964 = vshrl.u32 683565275, %v963
    %v965 = vshll.u32 683565275, %v962
    %v966 = vshrl.u32 2475754826, %v963
    %v967 = vor.u32 %v965, %v966
    %v968 = vshll.u32 2475754826, %v962
    %v969 = vshrl.u32 2131351028, %v963
    %v970 = vor.u32 %v968, %v969
    %v971 = vshll.u32 2131351028, %v962
    %v972 = vshrl.u32 2102212464, %v963
    %v973 = vor.u32 %v971, %v972
    %v974 = vshll.u32 2102212464, %v962
    %v975 = vshrl.u32 920167782, %v963
    %v976 = vor.u32 %v974, %v975
    %v977 = vshll.u32 920167782, %v962
    %v978 = vshrl.u32 1326507024, %v963
    %v979 = vor.u32 %v977, %v978
    %vm980 = vcmp.lt.s32.totalorder %v961, 1
    %vm981 = vcmp.lt.s32.totalorder %v961, 2
    %vm982 = vcmp.lt.s32.totalorder %v961, 3
    %vm983 = vcmp.lt.s32.totalorder %v961, 4
    %v984 = vsel %vm980, %v964, %v967
    %v985 = vsel %vm983, %v973, 2102212464
    %v986 = vsel %vm982, %v970, %v985
    %v987 = vsel %vm981, %v984, %v986
    %v988 = vsel %vm980, %v967, %v970
    %v989 = vsel %vm983, %v976, 920167782
    %v990 = vsel %vm982, %v973, %v989
    %v991 = vsel %vm981, %v988, %v990
    %v992 = vsel %vm980, %v970, %v973
    %v993 = vsel %vm983, %v979, 1326507024
    %v994 = vsel %vm982, %v976, %v993
    %v995 = vsel %vm981, %v992, %v994
    %v996 = vshll.u32 %v956, 8
    %v997 = vmul.u32.u64.compose %v996, %v995
    %v998 = vextract.low.u32 %v997
    %v999 = vextract.high.u32 %v997
    %v1000 = vmul.u32.u64.compose %v996, %v991
    %v1001 = vextract.low.u32 %v1000
    %v1002 = vextract.high.u32 %v1000
    %v1003 = vmul.u32 %v996, %v987
    %v1004 = vadd.s32 %v999, %v1001
    %vm1005 = vc.u32 %v999, %v1001
    %v1006 = vadd.s32 %v1002, 1
    %v1007 = vsel %vm1005, %v1006, %v1002
    %v1008 = vadd.s32 %v1003, %v1007
    %v1009 = vadd.s32 %v1008, 536870912
    %v1010 = vshrl.u32 %v1009, 30
    %v1011 = vshll.u32 %v1010, 30
    %v1012 = vsub.s32 %v1008, %v1011
    %vm1013 = vcmp.lt.s32.totalorder %v1012, 0
    %v1014 = vsub.s32 0, %v1012
    %v1015 = vsel %vm1013, %v1014, %v1012
    %v1016 = vclz %v1015
    %v1017 = vsub.s32 %v1016, 2
    %vm1018 = vcmp.gt.s32.totalorder 0, %v1017
    %v1019 = vsel %vm1018, 0, %v1017
    %v1020 = vsub.s32 32, %v1019
    %v1021 = vshll.u32 %v1012, %v1019
    %v1022 = vshrl.u32 %v1004, %v1020
    %v1023 = vor.u32 %v1021, %v1022
    %v1024 = vsub.s32 4294967266, %v1019
    %v1025 = vadd.s32 %v1024, 127
    %v1026 = vshll.u32 %v1025, 23
    %v1027 = vor.u32 4788187, %v1026
    %v1028 = vand.u32 2147483647, %v1027
    %v1030 = vcvt.s32.f32 %v1023
    %v1031 = vmul.f32 %v1030, %v1028
    %v1032 = vxor.u32 %v1031, 2147483648
    %v1033 = vsel %vm950, %v1032, %v1031
    %v1034 = vsub.s32 4, %v1010
    %v1035 = vsel %vm950, %v1034, %v1010
    %v1036 = vsel %vm949, %v432, %v1033
    %v1037 = vsel %vm949, 0, %v1035
    %v1038 = vcosq.f32.pop %v1036
    %v1039 = vsinq.f32.pop %v1036
    %vm1040 = vweird.f32 %v432
    %v1041 = vadd.s32 %v1037, 3
    %v1042 = vand.u32 %v1041, 3
    %vm1043 = vcmp.lt.s32.totalorder %v1042, 2
    %vm1044 = vcmp.eq.s32.totalorder %v1042, 0
    %v1045 = vxor.u32 %v1039, 2147483648
    %v1046 = vsel %vm1044, %v1038, %v1045
    %vm1047 = vcmp.eq.s32.totalorder %v1042, 2
    %v1048 = vxor.u32 %v1038, 2147483648
    %v1049 = vsel %vm1047, %v1048, %v1039
    %v1050 = vsel %vm1043, %v1046, %v1049
    %v1051 = vsel %vm1040, nan, %v1050
    %v1052 = vand.u32 2147483647, %v434
    %vm1053 = vcmp.le.f32.partialorder %v1052, 0.7853982
    %vm1054 = vcmp.lt.s32.totalorder %v434, 0
    %v1055 = vand.u32 %v434, 2139095040
    %v1056 = vshrl.u32 %v1055, 23
    %v1057 = vsub.s32 %v1056, 127
    %v1058 = vand.u32 2147483647, %v434
    %v1059 = vand.u32 %v1058, 8388607
    %v1060 = vor.u32 %v1059, 8388608
    %v1061 = vsub.s32 0, %v1060
    %v1062 = vadd.s32 %v1057, 1
    %vm1063 = vcmp.gt.s32.totalorder %v1062, 0
    %v1064 = vsel %vm1063, %v1062, 0
    %v1065 = vshrl.u32 %v1064, 5
    %v1066 = vand.u32 %v1064, 31
    %v1067 = vsub.s32 32, %v1066
    %v1068 = vshrl.u32 683565275, %v1067
    %v1069 = vshll.u32 683565275, %v1066
    %v1070 = vshrl.u32 2475754826, %v1067
    %v1071 = vor.u32 %v1069, %v1070
    %v1072 = vshll.u32 2475754826, %v1066
    %v1073 = vshrl.u32 2131351028, %v1067
    %v1074 = vor.u32 %v1072, %v1073
    %v1075 = vshll.u32 2131351028, %v1066
    %v1076 = vshrl.u32 2102212464, %v1067
    %v1077 = vor.u32 %v1075, %v1076
    %v1078 = vshll.u32 2102212464, %v1066
    %v1079 = vshrl.u32 920167782, %v1067
    %v1080 = vor.u32 %v1078, %v1079
    %v1081 = vshll.u32 920167782, %v1066
    %v1082 = vshrl.u32 1326507024, %v1067
    %v1083 = vor.u32 %v1081, %v1082
    %vm1084 = vcmp.lt.s32.totalorder %v1065, 1
    %vm1085 = vcmp.lt.s32.totalorder %v1065, 2
    %vm1086 = vcmp.lt.s32.totalorder %v1065, 3
    %vm1087 = vcmp.lt.s32.totalorder %v1065, 4
    %v1088 = vsel %vm1084, %v1068, %v1071
    %v1089 = vsel %vm1087, %v1077, 2102212464
    %v1090 = vsel %vm1086, %v1074, %v1089
    %v1091 = vsel %vm1085, %v1088, %v1090
    %v1092 = vsel %vm1084, %v1071, %v1074
    %v1093 = vsel %vm1087, %v1080, 920167782
    %v1094 = vsel %vm1086, %v1077, %v1093
    %v1095 = vsel %vm1085, %v1092, %v1094
    %v1096 = vsel %vm1084, %v1074, %v1077
    %v1097 = vsel %vm1087, %v1083, 1326507024
    %v1098 = vsel %vm1086, %v1080, %v1097
    %v1099 = vsel %vm1085, %v1096, %v1098
    %v1100 = vshll.u32 %v1060, 8
    %v1101 = vmul.u32.u64.compose %v1100, %v1099
    %v1102 = vextract.low.u32 %v1101
    %v1103 = vextract.high.u32 %v1101
    %v1104 = vmul.u32.u64.compose %v1100, %v1095
    %v1105 = vextract.low.u32 %v1104
    %v1106 = vextract.high.u32 %v1104
    %v1107 = vmul.u32 %v1100, %v1091
    %v1108 = vadd.s32 %v1103, %v1105
    %vm1109 = vc.u32 %v1103, %v1105
    %v1110 = vadd.s32 %v1106, 1
    %v1111 = vsel %vm1109, %v1110, %v1106
    %v1112 = vadd.s32 %v1107, %v1111
    %v1113 = vadd.s32 %v1112, 536870912
    %v1114 = vshrl.u32 %v1113, 30
    %v1115 = vshll.u32 %v1114, 30
    %v1116 = vsub.s32 %v1112, %v1115
    %vm1117 = vcmp.lt.s32.totalorder %v1116, 0
    %v1118 = vsub.s32 0, %v1116
    %v1119 = vsel %vm1117, %v1118, %v1116
    %v1120 = vclz %v1119
    %v1121 = vsub.s32 %v1120, 2
    %vm1122 = vcmp.gt.s32.totalorder 0, %v1121
    %v1123 = vsel %vm1122, 0, %v1121
    %v1124 = vsub.s32 32, %v1123
    %v1125 = vshll.u32 %v1116, %v1123
    %v1126 = vshrl.u32 %v1108, %v1124
    %v1127 = vor.u32 %v1125, %v1126
    %v1128 = vsub.s32 4294967266, %v1123
    %v1129 = vadd.s32 %v1128, 127
    %v1130 = vshll.u32 %v1129, 23
    %v1131 = vor.u32 4788187, %v1130
    %v1132 = vand.u32 2147483647, %v1131
    %v1134 = vcvt.s32.f32 %v1127
    %v1135 = vmul.f32 %v1134, %v1132
    %v1136 = vxor.u32 %v1135, 2147483648
    %v1137 = vsel %vm1054, %v1136, %v1135
    %v1138 = vsub.s32 4, %v1114
    %v1139 = vsel %vm1054, %v1138, %v1114
    %v1140 = vsel %vm1053, %v434, %v1137
    %v1141 = vsel %vm1053, 0, %v1139
    %v1142 = vcosq.f32.pop %v1140
    %v1143 = vsinq.f32.pop %v1140
    %vm1144 = vweird.f32 %v434
    %v1145 = vadd.s32 %v1141, 3
    %v1146 = vand.u32 %v1145, 3
    %vm1147 = vcmp.lt.s32.totalorder %v1146, 2
    %vm1148 = vcmp.eq.s32.totalorder %v1146, 0
    %v1149 = vxor.u32 %v1143, 2147483648
    %v1150 = vsel %vm1148, %v1142, %v1149
    %vm1151 = vcmp.eq.s32.totalorder %v1146, 2
    %v1152 = vxor.u32 %v1142, 2147483648
    %v1153 = vsel %vm1151, %v1152, %v1143
    %v1154 = vsel %vm1147, %v1150, %v1153
    %v1155 = vsel %vm1144, nan, %v1154
    %v1156 = vand.u32 2147483647, %v503
    %vm1157 = vcmp.le.f32.partialorder %v1156, 0.7853982
    %vm1158 = vcmp.lt.s32.totalorder %v503, 0
    %v1159 = vand.u32 %v503, 2139095040
    %v1160 = vshrl.u32 %v1159, 23
    %v1161 = vsub.s32 %v1160, 127
    %v1162 = vand.u32 2147483647, %v503
    %v1163 = vand.u32 %v1162, 8388607
    %v1164 = vor.u32 %v1163, 8388608
    %v1165 = vsub.s32 0, %v1164
    %v1166 = vadd.s32 %v1161, 1
    %vm1167 = vcmp.gt.s32.totalorder %v1166, 0
    %v1168 = vsel %vm1167, %v1166, 0
    %v1169 = vshrl.u32 %v1168, 5
    %v1170 = vand.u32 %v1168, 31
    %v1171 = vsub.s32 32, %v1170
    %v1172 = vshrl.u32 683565275, %v1171
    %v1173 = vshll.u32 683565275, %v1170
    %v1174 = vshrl.u32 2475754826, %v1171
    %v1175 = vor.u32 %v1173, %v1174
    %v1176 = vshll.u32 2475754826, %v1170
    %v1177 = vshrl.u32 2131351028, %v1171
    %v1178 = vor.u32 %v1176, %v1177
    %v1179 = vshll.u32 2131351028, %v1170
    %v1180 = vshrl.u32 2102212464, %v1171
    %v1181 = vor.u32 %v1179, %v1180
    %v1182 = vshll.u32 2102212464, %v1170
    %v1183 = vshrl.u32 920167782, %v1171
    %v1184 = vor.u32 %v1182, %v1183
    %v1185 = vshll.u32 920167782, %v1170
    %v1186 = vshrl.u32 1326507024, %v1171
    %v1187 = vor.u32 %v1185, %v1186
    %vm1188 = vcmp.lt.s32.totalorder %v1169, 1
    %vm1189 = vcmp.lt.s32.totalorder %v1169, 2
    %vm1190 = vcmp.lt.s32.totalorder %v1169, 3
    %vm1191 = vcmp.lt.s32.totalorder %v1169, 4
    %v1192 = vsel %vm1188, %v1172, %v1175
    %v1193 = vsel %vm1191, %v1181, 2102212464
    %v1194 = vsel %vm1190, %v1178, %v1193
    %v1195 = vsel %vm1189, %v1192, %v1194
    %v1196 = vsel %vm1188, %v1175, %v1178
    %v1197 = vsel %vm1191, %v1184, 920167782
    %v1198 = vsel %vm1190, %v1181, %v1197
    %v1199 = vsel %vm1189, %v1196, %v1198
    %v1200 = vsel %vm1188, %v1178, %v1181
    %v1201 = vsel %vm1191, %v1187, 1326507024
    %v1202 = vsel %vm1190, %v1184, %v1201
    %v1203 = vsel %vm1189, %v1200, %v1202
    %v1204 = vshll.u32 %v1164, 8
    %v1205 = vmul.u32.u64.compose %v1204, %v1203
    %v1206 = vextract.low.u32 %v1205
    %v1207 = vextract.high.u32 %v1205
    %v1208 = vmul.u32.u64.compose %v1204, %v1199
    %v1209 = vextract.low.u32 %v1208
    %v1210 = vextract.high.u32 %v1208
    %v1211 = vmul.u32 %v1204, %v1195
    %v1212 = vadd.s32 %v1207, %v1209
    %vm1213 = vc.u32 %v1207, %v1209
    %v1214 = vadd.s32 %v1210, 1
    %v1215 = vsel %vm1213, %v1214, %v1210
    %v1216 = vadd.s32 %v1211, %v1215
    %v1217 = vadd.s32 %v1216, 536870912
    %v1218 = vshrl.u32 %v1217, 30
    %v1219 = vshll.u32 %v1218, 30
    %v1220 = vsub.s32 %v1216, %v1219
    %vm1221 = vcmp.lt.s32.totalorder %v1220, 0
    %v1222 = vsub.s32 0, %v1220
    %v1223 = vsel %vm1221, %v1222, %v1220
    %v1224 = vclz %v1223
    %v1225 = vsub.s32 %v1224, 2
    %vm1226 = vcmp.gt.s32.totalorder 0, %v1225
    %v1227 = vsel %vm1226, 0, %v1225
    %v1228 = vsub.s32 32, %v1227
    %v1229 = vshll.u32 %v1220, %v1227
    %v1230 = vshrl.u32 %v1212, %v1228
    %v1231 = vor.u32 %v1229, %v1230
    %v1232 = vsub.s32 4294967266, %v1227
    %v1233 = vadd.s32 %v1232, 127
    %v1234 = vshll.u32 %v1233, 23
    %v1235 = vor.u32 4788187, %v1234
    %v1236 = vand.u32 2147483647, %v1235
    %v1238 = vcvt.s32.f32 %v1231
    %v1239 = vmul.f32 %v1238, %v1236
    %v1240 = vxor.u32 %v1239, 2147483648
    %v1241 = vsel %vm1158, %v1240, %v1239
    %v1242 = vsub.s32 4, %v1218
    %v1243 = vsel %vm1158, %v1242, %v1218
    %v1244 = vsel %vm1157, %v503, %v1241
    %v1245 = vsel %vm1157, 0, %v1243
    %v1246 = vcosq.f32.pop %v1244
    %v1247 = vsinq.f32.pop %v1244
    %vm1248 = vweird.f32 %v503
    %v1249 = vadd.s32 %v1245, 3
    %v1250 = vand.u32 %v1249, 3
    %vm1251 = vcmp.lt.s32.totalorder %v1250, 2
    %vm1252 = vcmp.eq.s32.totalorder %v1250, 0
    %v1253 = vxor.u32 %v1247, 2147483648
    %v1254 = vsel %vm1252, %v1246, %v1253
    %vm1255 = vcmp.eq.s32.totalorder %v1250, 2
    %v1256 = vxor.u32 %v1246, 2147483648
    %v1257 = vsel %vm1255, %v1256, %v1247
    %v1258 = vsel %vm1251, %v1254, %v1257
    %v1259 = vsel %vm1248, nan, %v1258
    %v1260 = vand.u32 2147483647, %v505
    %vm1261 = vcmp.le.f32.partialorder %v1260, 0.7853982
    %vm1262 = vcmp.lt.s32.totalorder %v505, 0
    %v1263 = vand.u32 %v505, 2139095040
    %v1264 = vshrl.u32 %v1263, 23
    %v1265 = vsub.s32 %v1264, 127
    %v1266 = vand.u32 2147483647, %v505
    %v1267 = vand.u32 %v1266, 8388607
    %v1268 = vor.u32 %v1267, 8388608
    %v1269 = vsub.s32 0, %v1268
    %v1270 = vadd.s32 %v1265, 1
    %vm1271 = vcmp.gt.s32.totalorder %v1270, 0
    %v1272 = vsel %vm1271, %v1270, 0
    %v1273 = vshrl.u32 %v1272, 5
    %v1274 = vand.u32 %v1272, 31
    %v1275 = vsub.s32 32, %v1274
    %v1276 = vshrl.u32 683565275, %v1275
    %v1277 = vshll.u32 683565275, %v1274
    %v1278 = vshrl.u32 2475754826, %v1275
    %v1279 = vor.u32 %v1277, %v1278
    %v1280 = vshll.u32 2475754826, %v1274
    %v1281 = vshrl.u32 2131351028, %v1275
    %v1282 = vor.u32 %v1280, %v1281
    %v1283 = vshll.u32 2131351028, %v1274
    %v1284 = vshrl.u32 2102212464, %v1275
    %v1285 = vor.u32 %v1283, %v1284
    %v1286 = vshll.u32 2102212464, %v1274
    %v1287 = vshrl.u32 920167782, %v1275
    %v1288 = vor.u32 %v1286, %v1287
    %v1289 = vshll.u32 920167782, %v1274
    %v1290 = vshrl.u32 1326507024, %v1275
    %v1291 = vor.u32 %v1289, %v1290
    %vm1292 = vcmp.lt.s32.totalorder %v1273, 1
    %vm1293 = vcmp.lt.s32.totalorder %v1273, 2
    %vm1294 = vcmp.lt.s32.totalorder %v1273, 3
    %vm1295 = vcmp.lt.s32.totalorder %v1273, 4
    %v1296 = vsel %vm1292, %v1276, %v1279
    %v1297 = vsel %vm1295, %v1285, 2102212464
    %v1298 = vsel %vm1294, %v1282, %v1297
    %v1299 = vsel %vm1293, %v1296, %v1298
    %v1300 = vsel %vm1292, %v1279, %v1282
    %v1301 = vsel %vm1295, %v1288, 920167782
    %v1302 = vsel %vm1294, %v1285, %v1301
    %v1303 = vsel %vm1293, %v1300, %v1302
    %v1304 = vsel %vm1292, %v1282, %v1285
    %v1305 = vsel %vm1295, %v1291, 1326507024
    %v1306 = vsel %vm1294, %v1288, %v1305
    %v1307 = vsel %vm1293, %v1304, %v1306
    %v1308 = vshll.u32 %v1268, 8
    %v1309 = vmul.u32.u64.compose %v1308, %v1307
    %v1310 = vextract.low.u32 %v1309
    %v1311 = vextract.high.u32 %v1309
    %v1312 = vmul.u32.u64.compose %v1308, %v1303
    %v1313 = vextract.low.u32 %v1312
    %v1314 = vextract.high.u32 %v1312
    %v1315 = vmul.u32 %v1308, %v1299
    %v1316 = vadd.s32 %v1311, %v1313
    %vm1317 = vc.u32 %v1311, %v1313
    %v1318 = vadd.s32 %v1314, 1
    %v1319 = vsel %vm1317, %v1318, %v1314
    %v1320 = vadd.s32 %v1315, %v1319
    %v1321 = vadd.s32 %v1320, 536870912
    %v1322 = vshrl.u32 %v1321, 30
    %v1323 = vshll.u32 %v1322, 30
    %v1324 = vsub.s32 %v1320, %v1323
    %vm1325 = vcmp.lt.s32.totalorder %v1324, 0
    %v1326 = vsub.s32 0, %v1324
    %v1327 = vsel %vm1325, %v1326, %v1324
    %v1328 = vclz %v1327
    %v1329 = vsub.s32 %v1328, 2
    %vm1330 = vcmp.gt.s32.totalorder 0, %v1329
    %v1331 = vsel %vm1330, 0, %v1329
    %v1332 = vsub.s32 32, %v1331
    %v1333 = vshll.u32 %v1324, %v1331
    %v1334 = vshrl.u32 %v1316, %v1332
    %v1335 = vor.u32 %v1333, %v1334
    %v1336 = vsub.s32 4294967266, %v1331
    %v1337 = vadd.s32 %v1336, 127
    %v1338 = vshll.u32 %v1337, 23
    %v1339 = vor.u32 4788187, %v1338
    %v1340 = vand.u32 2147483647, %v1339
    %v1342 = vcvt.s32.f32 %v1335
    %v1343 = vmul.f32 %v1342, %v1340
    %v1344 = vxor.u32 %v1343, 2147483648
    %v1345 = vsel %vm1262, %v1344, %v1343
    %v1346 = vsub.s32 4, %v1322
    %v1347 = vsel %vm1262, %v1346, %v1322
    %v1348 = vsel %vm1261, %v505, %v1345
    %v1349 = vsel %vm1261, 0, %v1347
    %v1350 = vcosq.f32.pop %v1348
    %v1351 = vsinq.f32.pop %v1348
    %vm1352 = vweird.f32 %v505
    %v1353 = vadd.s32 %v1349, 3
    %v1354 = vand.u32 %v1353, 3
    %vm1355 = vcmp.lt.s32.totalorder %v1354, 2
    %vm1356 = vcmp.eq.s32.totalorder %v1354, 0
    %v1357 = vxor.u32 %v1351, 2147483648
    %v1358 = vsel %vm1356, %v1350, %v1357
    %vm1359 = vcmp.eq.s32.totalorder %v1354, 2
    %v1360 = vxor.u32 %v1350, 2147483648
    %v1361 = vsel %vm1359, %v1360, %v1351
    %v1362 = vsel %vm1355, %v1358, %v1361
    %v1363 = vsel %vm1352, nan, %v1362
    %v1364 = vsel %vm524, %v290, %v635
    %v1365 = vsel %vm525, %v292, %v739
    %v1366 = vsel %vm526, %v361, %v843
    %v1367 = vsel %vm527, %v363, %v947
    %v1368 = vsel %vm528, %v432, %v1051
    %v1369 = vsel %vm529, %v434, %v1155
    %v1370 = vsel %vm530, %v503, %v1259
    %v1371 = vsel %vm531, %v505, %v1363
    %v1380 = vcombine.low %v1364, %v1365
    %v1381 = vcombine.low %v1366, %v1367
    %v1382 = vcombine.low %v1368, %v1369
    %v1383 = vcombine.low %v1370, %v1371
    %v1385 = vunpack.c.l.s4 1966171168
    %v1386 = vunpack.c.0.s8 %v1385
    %v1387 = vlaneseq
    %v1388 = vshrl.u32 %v1387, 7
    %v1389 = vsub.s32 %v1386, %v1388
    %v1390 = vrot.slane %v1380, %v1389
    %v1392 = vunpack.c.l.s4 1966171168
    %v1393 = vunpack.c.0.s8 %v1392
    %v1394 = vlaneseq
    %v1395 = vshrl.u32 %v1394, 7
    %v1396 = vsub.s32 %v1393, %v1395
    %v1397 = vrot.slane %v1381, %v1396
    %v1399 = vunpack.c.l.s4 1966171168
    %v1400 = vunpack.c.0.s8 %v1399
    %v1401 = vlaneseq
    %v1402 = vshrl.u32 %v1401, 7
    %v1403 = vsub.s32 %v1400, %v1402
    %v1404 = vrot.slane %v1382, %v1403
    %v1406 = vunpack.c.l.s4 1966171168
    %v1407 = vunpack.c.0.s8 %v1406
    %v1408 = vlaneseq
    %v1409 = vshrl.u32 %v1408, 7
    %v1410 = vsub.s32 %v1407, %v1409
    %v1411 = vrot.slane %v1383, %v1410
    %v1412 = vcombine.low %v1390, %v1397
    %v1413 = vcombine.low %v1404, %v1411
    %v1415 = vunpack.c.l.s4 1966171168
    %v1416 = vunpack.c.0.s8 %v1415
    %v1417 = vlaneseq
    %v1418 = vshrl.u32 %v1417, 7
    %v1419 = vsub.s32 %v1416, %v1418
    %v1420 = vrot.slane %v1412, %v1419
    %v1422 = vunpack.c.l.s4 1966171168
    %v1423 = vunpack.c.0.s8 %v1422
    %v1424 = vlaneseq
    %v1425 = vshrl.u32 %v1424, 7
    %v1426 = vsub.s32 %v1423, %v1425
    %v1427 = vrot.slane %v1413, %v1426
    %v1428 = vcombine.low %v1420, %v1427
    %1430 = vst [vmem:[#allocation8] sm:$0xff] %v1428
    // Predicated region
    $region26: #{tpu_custom_call.1} parent=1 // pred_check
      _
    $region27: #{tpu_custom_call.1} parent=1 // pred_check_branch
      %1432 = sbr.rel (0) target = $region29
    $region28: #{tpu_custom_call.1} parent=1 // pred_region
      %s1434 = ssub.s32 128, 128
      %1435 = vsyncadd [#allocation4], %s1434
      %s1437 = sshll.u32 [#allocation8], 4
      %s1438 = int_to_ptr.vmem [resolvable:$true] %s1437
      %1440 = dma.vmem_to_hbm [thread:$0]  %s1438, 128, %s3, [#allocation4]
    $region29: #{tpu_custom_call.1} parent=1 // pred_fallthru
      _
    // Predicated region
    $region30: #{tpu_custom_call.1} parent=1 // pred_check
      _
    $region31: #{tpu_custom_call.1} parent=1 // pred_check_branch
      %1442 = sbr.rel (0) target = $region33
    $region32: #{tpu_custom_call.1} parent=1 // pred_region
      %1443 = dma.done [#allocation4], 128
    $region33: #{tpu_custom_call.1} parent=1 // pred_fallthru
      _
    %1444 = vsyncpa [#allocation3], 1
    %1445 = vsyncpa [#allocation6], 1
    %1446 = vsyncpa [#allocation4], 1

</llo_original>
